<compile_context>
chip_gen: v5e
topology: v5e:2x2
jax: 0.10.0
libtpu: 0.0.40
codegen_flags: <defaults>
</compile_context>

<pallas_src>
import jax
import jax.numpy as jnp
from jax import lax
from jax.experimental import pallas as pl
from jax.experimental.pallas import tpu as pltpu


# ---------------------------------------------------------------------------
# Kernel 1: embedding gather + additive attention + fused LSTM-cell step.
# ---------------------------------------------------------------------------
def attn_lstm_state_kernel(
    ids_ref,        # (B,)      SMEM int32, scalar-prefetched token ids
    emb_hbm,        # (V, E)    HBM (pl.ANY) embedding table — row-gathered via DMA
    h_ref,          # (B, H)    f32 top-layer hidden state
    c_ref,          # (B, H)    f32 cell state
    enc_ref,        # (B, S, H) encoder outputs (matmul dtype)
    mask_ref,       # (B, S)    f32, 1.0 == masked source position
    wh_t_ref,       # (H, H)    fc_hidden.weight^T   (matmul dtype)
    we_t_ref,       # (H, H)    fc_encoder.weight^T  (matmul dtype)
    v_ref,          # (1, H)    fc_v.weight          (f32, used on VPU)
    w_gates_ref,    # (E+2H,4H) fused [W_ih ; W_hh]^T (matmul dtype)
    b_gates_ref,    # (1, 4H)   b_ih + b_hh          (f32)
    hout_ref,       # (B, H)    out f32
    cout_ref,       # (B, H)    out f32
    emb_rows,       # scratch VMEM (B, E), matmul dtype
    emb_sem,        # DMA semaphores (B,)
):
    B, H = h_ref.shape
    S = enc_ref.shape[1]
    mm_dtype = w_gates_ref.dtype

    # ---- embedding lookup: DMA-gather only the B needed rows from HBM ------
    def emb_copy(i):
        return pltpu.make_async_copy(
            emb_hbm.at[pl.ds(ids_ref[i], 1), :],
            emb_rows.at[pl.ds(i, 1), :],
            emb_sem.at[i])

    for i in range(B):          # B is small and static -> unrolled
        emb_copy(i).start()

    h = h_ref[...]                                     # (B, H)  f32
    c = c_ref[...]                                     # (B, H)  f32
    enc_mm = enc_ref[...]                              # (B, S, H) mm dtype
    enc_f32 = enc_mm.astype(jnp.float32)

    # ---- additive attention: v^T tanh(W_h h + W_e enc) ----------------------
    q = jnp.dot(h.astype(mm_dtype), wh_t_ref[...],
                preferred_element_type=jnp.float32)                      # (B, H)
    # single flattened (B*S, H) @ (H, H) matmul instead of B tiny batched ones
    k = jnp.dot(enc_mm.reshape(B * S, H), we_t_ref[...],
                preferred_element_type=jnp.float32).reshape(B, S, H)
    t = jnp.tanh(k + q[:, None, :])                                      # (B, S, H)
    scores = jnp.sum(t * v_ref[...][None], axis=-1)                      # (B, S)
    scores = jnp.where(mask_ref[...] > 0, jnp.float32(-1e10), scores)

    # softmax over source positions (f32)
    m = jnp.max(scores, axis=-1, keepdims=True)
    e = jnp.exp(scores - m)
    attn = e / jnp.sum(e, axis=-1, keepdims=True)                        # (B, S)

    # ---- context on the VPU (an M=1 bmm would waste a full MXU pass) --------
    context = jnp.sum(attn[:, :, None] * enc_f32, axis=1)                # (B, H) f32

    # wait for the gathered embedding rows (overlapped with attention compute)
    for i in range(B):
        emb_copy(i).wait()
    embedded = emb_rows[...]                                             # (B, E) mm

    # ---- single fused LSTM gate matmul: [emb | ctx | h] @ [W_ih ; W_hh]^T ----
    x_cat = jnp.concatenate(
        [embedded, context.astype(mm_dtype), h.astype(mm_dtype)], axis=-1)
    gates = (jnp.dot(x_cat, w_gates_ref[...],
                     preferred_element_type=jnp.float32)
             + b_gates_ref[...])                                         # (B, 4H) f32
    # NOTE: for H < 128 these are intra-vreg lane sub-slices; cheap at toy sizes
    # and layout-free whenever H is a multiple of 128.
    i_g = jax.nn.sigmoid(gates[:, 0:H])
    f_g = jax.nn.sigmoid(gates[:, H:2 * H])
    g_g = jnp.tanh(gates[:, 2 * H:3 * H])
    o_g = jax.nn.sigmoid(gates[:, 3 * H:4 * H])
    c_new = f_g * c + i_g * g_g
    h_new = o_g * jnp.tanh(c_new)

    hout_ref[...] = h_new
    cout_ref[...] = c_new


# ---------------------------------------------------------------------------
# Kernel 2: vocab-tiled classifier (lane-dense, weight-streaming, megacore-able).
# ---------------------------------------------------------------------------
def classifier_kernel(h_ref, wcls_t_ref, bcls_ref, logits_ref):
    logits_ref[...] = (
        jnp.dot(h_ref[...], wcls_t_ref[...], preferred_element_type=jnp.float32)
        + bcls_ref[...])


def bahdanau_decoder_step(x_ids, params, decoder_state, encoder_outputs,
                          mask=None, matmul_dtype=jnp.float32, tile_v=None):
    """x_ids: (B, 1) int; decoder_state: (h0, c0) each (num_layers, B, H);
    encoder_outputs: (B, S, H); mask: optional bool broadcastable to (B, S).
    Returns (logits (B,1,V), (h (1,B,H), c (1,B,H)))."""
    h0, c0 = decoder_state
    B, S, H = encoder_outputs.shape
    V, E = params['embedding'].shape
    f32 = jnp.float32
    mm = matmul_dtype

    # ---- plain-JAX parameter repacking (transpose / concat / cast only) -----
    emb = params['embedding'].astype(mm)                        # (V, E) stays in HBM
    wh_t = params['fc_hidden_w'].T.astype(mm)                   # (H, H)
    we_t = params['fc_encoder_w'].T.astype(mm)                  # (H, H)
    v_w = params['fc_v_w'].astype(f32)                          # (1, H)
    w_gates = jnp.concatenate(
        [params['w_ih'].T, params['w_hh'].T], axis=0).astype(mm)  # (E+2H, 4H)
    b_gates = (params['b_ih'] + params['b_hh'])[None, :].astype(f32)  # (1, 4H)
    h_top = h0[-1].astype(f32)
    c_top = c0[-1].astype(f32)
    enc_mm = encoder_outputs.astype(mm)
    if mask is None:
        mask_f = jnp.zeros((B, S), f32)
    else:
        mask_f = jnp.broadcast_to(mask, (B, S)).astype(f32)
    ids = x_ids.reshape(B).astype(jnp.int32)

    # ---------------- kernel 1: attention + LSTM state ----------------------
    grid_spec = pltpu.PrefetchScalarGridSpec(
        num_scalar_prefetch=1,
        grid=(1,),
        in_specs=[
            pl.BlockSpec(memory_space=pl.ANY),                        # embedding (HBM)
            pl.BlockSpec((B, H), lambda i, ids: (0, 0)),              # h
            pl.BlockSpec((B, H), lambda i, ids: (0, 0)),              # c
            pl.BlockSpec((B, S, H), lambda i, ids: (0, 0, 0)),        # enc
            pl.BlockSpec((B, S), lambda i, ids: (0, 0)),              # mask
            pl.BlockSpec((H, H), lambda i, ids: (0, 0)),              # wh_t
            pl.BlockSpec((H, H), lambda i, ids: (0, 0)),              # we_t
            pl.BlockSpec((1, H), lambda i, ids: (0, 0)),              # v
            pl.BlockSpec((E + 2 * H, 4 * H), lambda i, ids: (0, 0)),  # w_gates
            pl.BlockSpec((1, 4 * H), lambda i, ids: (0, 0)),          # b_gates
        ],
        out_specs=(
            pl.BlockSpec((B, H), lambda i, ids: (0, 0)),
            pl.BlockSpec((B, H), lambda i, ids: (0, 0)),
        ),
        scratch_shapes=[
            pltpu.VMEM((B, E), mm),
            pltpu.SemaphoreType.DMA((B,)),
        ],
    )
    h_new, c_new = pl.pallas_call(
        attn_lstm_state_kernel,
        grid_spec=grid_spec,
        out_shape=(jax.ShapeDtypeStruct((B, H), f32),
                   jax.ShapeDtypeStruct((B, H), f32)),
        compiler_params=pltpu.CompilerParams(
            dimension_semantics=("arbitrary",),
            vmem_limit_bytes=32 * 1024 * 1024),
    )(ids, emb, h_top, c_top, enc_mm, mask_f, wh_t, we_t, v_w, w_gates, b_gates)

    # ---------------- kernel 2: vocab-tiled classifier ----------------------
    v_pad = ((V + 127) // 128) * 128                   # lane-dense, unmasked stores
    wcls_t = params['fc_cls_w'].T.astype(mm)           # (H, V)
    bcls = params['fc_cls_b'][None, :].astype(f32)     # (1, V)
    if v_pad != V:
        wcls_t = jnp.pad(wcls_t, ((0, 0), (0, v_pad - V)))
        bcls = jnp.pad(bcls, ((0, 0), (0, v_pad - V)))
    if tile_v is None:
        tile_v = min(v_pad, 2048)                      # fits v7x's 32 MiB scoped VMEM
    tile_v = max(128, (tile_v // 128) * 128)
    while v_pad % tile_v != 0:                         # keep the grid exact
        tile_v -= 128
    num_v_tiles = v_pad // tile_v

    logits_pad = pl.pallas_call(
        classifier_kernel,
        out_shape=jax.ShapeDtypeStruct((B, v_pad), f32),
        grid=(num_v_tiles,),
        in_specs=[
            pl.BlockSpec((B, H), lambda j: (0, 0)),
            pl.BlockSpec((H, tile_v), lambda j: (0, j)),
            pl.BlockSpec((1, tile_v), lambda j: (0, j)),
        ],
        out_specs=pl.BlockSpec((B, tile_v), lambda j: (0, j)),
        compiler_params=pltpu.CompilerParams(
            dimension_semantics=("parallel",),         # megacore split on v7x
            vmem_limit_bytes=32 * 1024 * 1024),
    )(h_new.astype(mm), wcls_t, bcls)

    logits = logits_pad[:, :V]
    return logits[:, None, :], (h_new[None, :, :], c_new[None, :, :])


# ---------------------------------------------------------------------------
# Pure-JAX reference mirroring the PyTorch forward (eval mode, num_layers=1).
# ---------------------------------------------------------------------------
def reference_step(x_ids, p, decoder_state, enc, mask=None):
    h0, c0 = decoder_state
    h, c = h0[-1], c0[-1]
    emb = p['embedding'][x_ids[:, 0]]                                 # (B, E)
    q = h @ p['fc_hidden_w'].T                                        # (B, H)
    k = enc @ p['fc_encoder_w'].T                                     # (B, S, H)
    t = jnp.tanh(q[:, None, :] + k)
    scores = jnp.squeeze(t @ p['fc_v_w'].T, -1)                       # (B, S)
    if mask is not None:
        scores = jnp.where(mask, -1e10, scores)
    attn = jax.nn.softmax(scores, axis=1)
    ctx = jnp.einsum('bs,bsh->bh', attn, enc)
    x_in = jnp.concatenate([emb, ctx], axis=-1)
    gates = x_in @ p['w_ih'].T + p['b_ih'] + h @ p['w_hh'].T + p['b_hh']
    H = h.shape[-1]
    i_g = jax.nn.sigmoid(gates[:, 0:H])
    f_g = jax.nn.sigmoid(gates[:, H:2 * H])
    g_g = jnp.tanh(gates[:, 2 * H:3 * H])
    o_g = jax.nn.sigmoid(gates[:, 3 * H:4 * H])
    c_new = f_g * c + i_g * g_g
    h_new = o_g * jnp.tanh(c_new)
    logits = h_new @ p['fc_cls_w'].T + p['fc_cls_b']
    return logits[:, None, :], (h_new[None], c_new[None])


if __name__ == "__main__":
    # small shapes implied by the forward: batch=2, src_seq_len=8, embed=32, hidden=32, vocab=64
    B, S, E, H, V = 2, 8, 32, 32, 64
    NUM_LAYERS = 1  # kernel implements the single-layer unidirectional LSTM case

    key = jax.random.PRNGKey(0)
    keys = jax.random.split(key, 12)
    params = {
        'embedding':    jax.random.normal(keys[0], (V, E), jnp.float32) * 0.1,
        'fc_hidden_w':  jax.random.normal(keys[1], (H, H), jnp.float32) * 0.1,
        'fc_encoder_w': jax.random.normal(keys[2], (H, H), jnp.float32) * 0.1,
        'fc_v_w':       jax.random.normal(keys[3], (1, H), jnp.float32) * 0.1,
        'w_ih':         jax.random.normal(keys[4], (4 * H, E + H), jnp.float32) * 0.1,
        'w_hh':         jax.random.normal(keys[5], (4 * H, H), jnp.float32) * 0.1,
        'b_ih':         jax.random.normal(keys[6], (4 * H,), jnp.float32) * 0.1,
        'b_hh':         jax.random.normal(keys[7], (4 * H,), jnp.float32) * 0.1,
        'fc_cls_w':     jax.random.normal(keys[8], (V, H), jnp.float32) * 0.1,
        'fc_cls_b':     jax.random.normal(keys[9], (V,), jnp.float32) * 0.1,
    }

    x_ids = jax.random.randint(keys[10], (B, 1), 0, V, jnp.int32)
    enc_outputs = jax.random.normal(keys[11], (B, S, H), jnp.float32)
    h0 = jax.random.normal(jax.random.PRNGKey(1), (NUM_LAYERS, B, H), jnp.float32)
    c0 = jax.random.normal(jax.random.PRNGKey(2), (NUM_LAYERS, B, H), jnp.float32)

    # 1) f32 matmuls, no mask — tight tolerance vs the pure-JAX reference
    logits, (h_new, c_new) = bahdanau_decoder_step(
        x_ids, params, (h0, c0), enc_outputs, matmul_dtype=jnp.float32)
    jax.block_until_ready((logits, h_new, c_new))
    ref_logits, (ref_h, ref_c) = reference_step(x_ids, params, (h0, c0), enc_outputs)
    assert logits.shape == (B, 1, V) and h_new.shape == (NUM_LAYERS, B, H)
    assert jnp.allclose(logits, ref_logits, atol=1e-4, rtol=1e-4)
    assert jnp.allclose(h_new, ref_h, atol=1e-4, rtol=1e-4)
    assert jnp.allclose(c_new, ref_c, atol=1e-4, rtol=1e-4)

    # 2) f32 matmuls, with a source-padding mask (masked_fill_ with -1e10 path)
    src_lens = jnp.array([S, 5], jnp.int32)
    mask = lax.broadcasted_iota(jnp.int32, (B, S), 1) >= src_lens[:, None]
    logits_m, (h_m, c_m) = bahdanau_decoder_step(
        x_ids, params, (h0, c0), enc_outputs, mask=mask, matmul_dtype=jnp.float32)
    jax.block_until_ready((logits_m, h_m, c_m))
    ref_logits_m, (ref_h_m, ref_c_m) = reference_step(
        x_ids, params, (h0, c0), enc_outputs, mask=mask)
    assert jnp.allclose(logits_m, ref_logits_m, atol=1e-4, rtol=1e-4)
    assert jnp.allclose(h_m, ref_h_m, atol=1e-4, rtol=1e-4)
    assert jnp.allclose(c_m, ref_c_m, atol=1e-4, rtol=1e-4)

    # 3) bf16 matmul operands (f32 accumulation, f32 softmax / nonlinearities)
    logits_bf, (h_bf, c_bf) = bahdanau_decoder_step(
        x_ids, params, (h0, c0), enc_outputs, matmul_dtype=jnp.bfloat16)
    jax.block_until_ready((logits_bf, h_bf, c_bf))
    assert jnp.allclose(logits_bf, ref_logits, atol=3e-2, rtol=3e-2)
    assert jnp.allclose(h_bf, ref_h, atol=3e-2, rtol=3e-2)
    assert jnp.allclose(c_bf, ref_c, atol=3e-2, rtol=3e-2)

    print("KERNEL_OK")
</pallas_src>

<mosaic_0001>
module attributes {stable_mosaic.version = 11 : i64} {
  func.func @attn_lstm_state_kernel(%arg0: i32, %arg1: memref<2xi32, #tpu.memory_space<smem>>, %arg2: memref<64x32xf32, #tpu.memory_space<any>>, %arg3: memref<2x32xf32, #tpu.memory_space<vmem>>, %arg4: memref<2x32xf32, #tpu.memory_space<vmem>>, %arg5: memref<2x8x32xf32, #tpu.memory_space<vmem>>, %arg6: memref<2x8xf32, #tpu.memory_space<vmem>>, %arg7: memref<32x32xf32, #tpu.memory_space<vmem>>, %arg8: memref<32x32xf32, #tpu.memory_space<vmem>>, %arg9: memref<1x32xf32, #tpu.memory_space<vmem>>, %arg10: memref<96x128xf32, #tpu.memory_space<vmem>>, %arg11: memref<1x128xf32, #tpu.memory_space<vmem>>, %arg12: memref<2x32xf32, #tpu.memory_space<vmem>>, %arg13: memref<2x32xf32, #tpu.memory_space<vmem>>, %arg14: memref<2x32xf32, #tpu.memory_space<vmem>>, %arg15: memref<2x!tpu.dma_semaphore, #tpu.memory_space<semaphore_mem>>) attributes {dimension_semantics = [#tpu.dimension_semantics<arbitrary>], iteration_bounds = array<i64: 1>, scalar_prefetch = 1 : i64, scratch_operands = 2 : i64, tpu.core_type = #tpu.core_type<tc>, window_params = [{}, {pipeline_mode = #tpu.pipeline_mode<synchronous>, transform_indices = @transform_1, window_bounds = array<i64: 2, 32>}, {pipeline_mode = #tpu.pipeline_mode<synchronous>, transform_indices = @transform_2, window_bounds = array<i64: 2, 32>}, {pipeline_mode = #tpu.pipeline_mode<synchronous>, transform_indices = @transform_3, window_bounds = array<i64: 2, 8, 32>}, {pipeline_mode = #tpu.pipeline_mode<synchronous>, transform_indices = @transform_4, window_bounds = array<i64: 2, 8>}, {pipeline_mode = #tpu.pipeline_mode<synchronous>, transform_indices = @transform_5, window_bounds = array<i64: 32, 32>}, {pipeline_mode = #tpu.pipeline_mode<synchronous>, transform_indices = @transform_6, window_bounds = array<i64: 32, 32>}, {pipeline_mode = #tpu.pipeline_mode<synchronous>, transform_indices = @transform_7, window_bounds = array<i64: 1, 32>}, {pipeline_mode = #tpu.pipeline_mode<synchronous>, transform_indices = @transform_8, window_bounds = array<i64: 96, 128>}, {pipeline_mode = #tpu.pipeline_mode<synchronous>, transform_indices = @transform_9, window_bounds = array<i64: 1, 128>}, {pipeline_mode = #tpu.pipeline_mode<synchronous>, transform_indices = @transform_10, window_bounds = array<i64: 2, 32>}, {pipeline_mode = #tpu.pipeline_mode<synchronous>, transform_indices = @transform_11, window_bounds = array<i64: 2, 32>}]} {
    %c0 = arith.constant 0 : index
    %0 = memref.load %arg1[%c0] : memref<2xi32, #tpu.memory_space<smem>>
    %c0_i32 = arith.constant 0 : i32
    %c0_i32_0 = arith.constant 0 : i32
    %1 = tpu.memref_slice %arg2[%0, %c0_i32_0] : memref<64x32xf32, #tpu.memory_space<any>> -> memref<1x32xf32, #tpu.memory_space<any>>
    %c0_i32_1 = arith.constant 0 : i32
    %c0_i32_2 = arith.constant 0 : i32
    %2 = tpu.memref_slice %arg14[%c0_i32_1, %c0_i32_2] : memref<2x32xf32, #tpu.memory_space<vmem>> -> memref<1x32xf32, #tpu.memory_space<vmem>>
    %3 = tpu.memref_slice %arg15[%c0_i32] : memref<2x!tpu.dma_semaphore, #tpu.memory_space<semaphore_mem>> -> memref<1x!tpu.dma_semaphore, #tpu.memory_space<semaphore_mem>>
    %4 = tpu.memref_squeeze %3 : memref<1x!tpu.dma_semaphore, #tpu.memory_space<semaphore_mem>> -> memref<!tpu.dma_semaphore, #tpu.memory_space<semaphore_mem>>
    tpu.enqueue_dma source(%1 : memref<1x32xf32, #tpu.memory_space<any>>) target(%2 : memref<1x32xf32, #tpu.memory_space<vmem>>) target_semaphore(%4 : memref<!tpu.dma_semaphore, #tpu.memory_space<semaphore_mem>>)
    %c1 = arith.constant 1 : index
    %5 = memref.load %arg1[%c1] : memref<2xi32, #tpu.memory_space<smem>>
    %c1_i32 = arith.constant 1 : i32
    %c0_i32_3 = arith.constant 0 : i32
    %6 = tpu.memref_slice %arg2[%5, %c0_i32_3] : memref<64x32xf32, #tpu.memory_space<any>> -> memref<1x32xf32, #tpu.memory_space<any>>
    %c1_i32_4 = arith.constant 1 : i32
    %c0_i32_5 = arith.constant 0 : i32
    %7 = tpu.memref_slice %arg14[%c1_i32_4, %c0_i32_5] : memref<2x32xf32, #tpu.memory_space<vmem>> -> memref<1x32xf32, #tpu.memory_space<vmem>>
    %8 = tpu.memref_slice %arg15[%c1_i32] : memref<2x!tpu.dma_semaphore, #tpu.memory_space<semaphore_mem>> -> memref<1x!tpu.dma_semaphore, #tpu.memory_space<semaphore_mem>>
    %9 = tpu.memref_squeeze %8 : memref<1x!tpu.dma_semaphore, #tpu.memory_space<semaphore_mem>> -> memref<!tpu.dma_semaphore, #tpu.memory_space<semaphore_mem>>
    tpu.enqueue_dma source(%6 : memref<1x32xf32, #tpu.memory_space<any>>) target(%7 : memref<1x32xf32, #tpu.memory_space<vmem>>) target_semaphore(%9 : memref<!tpu.dma_semaphore, #tpu.memory_space<semaphore_mem>>)
    %c0_6 = arith.constant 0 : index
    %c0_7 = arith.constant 0 : index
    %10 = vector.load %arg3[%c0_6, %c0_7] : memref<2x32xf32, #tpu.memory_space<vmem>>, vector<2x32xf32>
    %c0_8 = arith.constant 0 : index
    %c0_9 = arith.constant 0 : index
    %11 = vector.load %arg4[%c0_8, %c0_9] : memref<2x32xf32, #tpu.memory_space<vmem>>, vector<2x32xf32>
    %c0_10 = arith.constant 0 : index
    %c0_11 = arith.constant 0 : index
    %c0_12 = arith.constant 0 : index
    %12 = vector.load %arg5[%c0_10, %c0_11, %c0_12] : memref<2x8x32xf32, #tpu.memory_space<vmem>>, vector<2x8x32xf32>
    %c0_13 = arith.constant 0 : index
    %c0_14 = arith.constant 0 : index
    %13 = vector.load %arg7[%c0_13, %c0_14] : memref<32x32xf32, #tpu.memory_space<vmem>>, vector<32x32xf32>
    %cst = arith.constant dense<0.000000e+00> : vector<2x32xf32>
    %14 = tpu.matmul %10, %13, %cst {dimension_numbers = #tpu.dot_dimension_numbers<[1], [0], [0], [1], [0, 0, 1, 1], [], []>} : vector<2x32xf32>, vector<32x32xf32>, vector<2x32xf32> -> vector<2x32xf32>
    %15 = vector.shape_cast %12 : vector<2x8x32xf32> to vector<16x32xf32>
    %c0_15 = arith.constant 0 : index
    %c0_16 = arith.constant 0 : index
    %16 = vector.load %arg8[%c0_15, %c0_16] : memref<32x32xf32, #tpu.memory_space<vmem>>, vector<32x32xf32>
    %cst_17 = arith.constant dense<0.000000e+00> : vector<16x32xf32>
    %17 = tpu.matmul %15, %16, %cst_17 {dimension_numbers = #tpu.dot_dimension_numbers<[1], [0], [0], [1], [0, 0, 1, 1], [], []>} : vector<16x32xf32>, vector<32x32xf32>, vector<16x32xf32> -> vector<16x32xf32>
    %18 = vector.shape_cast %17 : vector<16x32xf32> to vector<2x8x32xf32>
    %19 = vector.shape_cast %14 : vector<2x32xf32> to vector<2x1x32xf32>
    %20 = vector.broadcast %19 : vector<2x1x32xf32> to vector<2x8x32xf32>
    %21 = arith.addf %18, %20 : vector<2x8x32xf32>
    %22 = math.tanh %21 : vector<2x8x32xf32>
    %c0_18 = arith.constant 0 : index
    %c0_19 = arith.constant 0 : index
    %23 = vector.load %arg9[%c0_18, %c0_19] : memref<1x32xf32, #tpu.memory_space<vmem>>, vector<1x32xf32>
    %24 = vector.shape_cast %23 : vector<1x32xf32> to vector<1x1x32xf32>
    %25 = vector.broadcast %24 : vector<1x1x32xf32> to vector<2x8x32xf32>
    %26 = arith.mulf %22, %25 : vector<2x8x32xf32>
    %cst_20 = arith.constant dense<0.000000e+00> : vector<2x8xf32>
    %27 = vector.multi_reduction <add>, %26, %cst_20 [2] : vector<2x8x32xf32> to vector<2x8xf32>
    %c0_21 = arith.constant 0 : index
    %c0_22 = arith.constant 0 : index
    %28 = vector.load %arg6[%c0_21, %c0_22] : memref<2x8xf32, #tpu.memory_space<vmem>>, vector<2x8xf32>
    %cst_23 = arith.constant 0.000000e+00 : f32
    %29 = vector.broadcast %cst_23 : f32 to vector<2x8xf32>
    %30 = arith.cmpf ogt, %28, %29 : vector<2x8xf32>
    %cst_24 = arith.constant -1.000000e+10 : f32
    %31 = vector.broadcast %cst_24 : f32 to vector<2x8xf32>
    %32 = arith.select %30, %31, %27 : vector<2x8xi1>, vector<2x8xf32>
    %cst_25 = arith.constant dense<0xFF800000> : vector<2xf32>
    %33 = vector.multi_reduction <maximumf>, %32, %cst_25 [1] : vector<2x8xf32> to vector<2xf32>
    %34 = vector.shape_cast %33 : vector<2xf32> to vector<2x1xf32>
    %35 = vector.broadcast %34 : vector<2x1xf32> to vector<2x8xf32>
    %36 = arith.subf %32, %35 : vector<2x8xf32>
    %37 = math.exp %36 : vector<2x8xf32>
    %cst_26 = arith.constant dense<0.000000e+00> : vector<2xf32>
    %38 = vector.multi_reduction <add>, %37, %cst_26 [1] : vector<2x8xf32> to vector<2xf32>
    %39 = vector.shape_cast %38 : vector<2xf32> to vector<2x1xf32>
    %40 = vector.broadcast %39 : vector<2x1xf32> to vector<2x8xf32>
    %41 = arith.divf %37, %40 : vector<2x8xf32>
    %42 = vector.shape_cast %41 : vector<2x8xf32> to vector<2x8x1xf32>
    %43 = vector.broadcast %42 : vector<2x8x1xf32> to vector<2x8x32xf32>
    %44 = arith.mulf %43, %12 : vector<2x8x32xf32>
    %cst_27 = arith.constant dense<0.000000e+00> : vector<2x32xf32>
    %45 = vector.multi_reduction <add>, %44, %cst_27 [1] : vector<2x8x32xf32> to vector<2x32xf32>
    %c0_28 = arith.constant 0 : index
    %46 = memref.load %arg1[%c0_28] : memref<2xi32, #tpu.memory_space<smem>>
    %c0_i32_29 = arith.constant 0 : i32
    %c0_i32_30 = arith.constant 0 : i32
    %47 = tpu.memref_slice %arg2[%46, %c0_i32_30] : memref<64x32xf32, #tpu.memory_space<any>> -> memref<1x32xf32, #tpu.memory_space<any>>
    %c0_i32_31 = arith.constant 0 : i32
    %c0_i32_32 = arith.constant 0 : i32
    %48 = tpu.memref_slice %arg14[%c0_i32_31, %c0_i32_32] : memref<2x32xf32, #tpu.memory_space<vmem>> -> memref<1x32xf32, #tpu.memory_space<vmem>>
    %49 = tpu.memref_slice %arg15[%c0_i32_29] : memref<2x!tpu.dma_semaphore, #tpu.memory_space<semaphore_mem>> -> memref<1x!tpu.dma_semaphore, #tpu.memory_space<semaphore_mem>>
    %50 = tpu.memref_squeeze %49 : memref<1x!tpu.dma_semaphore, #tpu.memory_space<semaphore_mem>> -> memref<!tpu.dma_semaphore, #tpu.memory_space<semaphore_mem>>
    tpu.wait_dma2 semaphore(%50 : memref<!tpu.dma_semaphore, #tpu.memory_space<semaphore_mem>>) src(%47 : memref<1x32xf32, #tpu.memory_space<any>>) dst(%48 : memref<1x32xf32, #tpu.memory_space<vmem>>)
    %c1_33 = arith.constant 1 : index
    %51 = memref.load %arg1[%c1_33] : memref<2xi32, #tpu.memory_space<smem>>
    %c1_i32_34 = arith.constant 1 : i32
    %c0_i32_35 = arith.constant 0 : i32
    %52 = tpu.memref_slice %arg2[%51, %c0_i32_35] : memref<64x32xf32, #tpu.memory_space<any>> -> memref<1x32xf32, #tpu.memory_space<any>>
    %c1_i32_36 = arith.constant 1 : i32
    %c0_i32_37 = arith.constant 0 : i32
    %53 = tpu.memref_slice %arg14[%c1_i32_36, %c0_i32_37] : memref<2x32xf32, #tpu.memory_space<vmem>> -> memref<1x32xf32, #tpu.memory_space<vmem>>
    %54 = tpu.memref_slice %arg15[%c1_i32_34] : memref<2x!tpu.dma_semaphore, #tpu.memory_space<semaphore_mem>> -> memref<1x!tpu.dma_semaphore, #tpu.memory_space<semaphore_mem>>
    %55 = tpu.memref_squeeze %54 : memref<1x!tpu.dma_semaphore, #tpu.memory_space<semaphore_mem>> -> memref<!tpu.dma_semaphore, #tpu.memory_space<semaphore_mem>>
    tpu.wait_dma2 semaphore(%55 : memref<!tpu.dma_semaphore, #tpu.memory_space<semaphore_mem>>) src(%52 : memref<1x32xf32, #tpu.memory_space<any>>) dst(%53 : memref<1x32xf32, #tpu.memory_space<vmem>>)
    %c0_38 = arith.constant 0 : index
    %c0_39 = arith.constant 0 : index
    %56 = vector.load %arg14[%c0_38, %c0_39] : memref<2x32xf32, #tpu.memory_space<vmem>>, vector<2x32xf32>
    %57 = tpu.concatenate %56, %45, %10 in 1 : vector<2x32xf32>, vector<2x32xf32>, vector<2x32xf32> -> vector<2x96xf32>
    %c0_40 = arith.constant 0 : index
    %c0_41 = arith.constant 0 : index
    %58 = vector.load %arg10[%c0_40, %c0_41] : memref<96x128xf32, #tpu.memory_space<vmem>>, vector<96x128xf32>
    %cst_42 = arith.constant dense<0.000000e+00> : vector<2x128xf32>
    %59 = tpu.matmul %57, %58, %cst_42 {dimension_numbers = #tpu.dot_dimension_numbers<[1], [0], [0], [1], [0, 0, 1, 1], [], []>} : vector<2x96xf32>, vector<96x128xf32>, vector<2x128xf32> -> vector<2x128xf32>
    %c0_43 = arith.constant 0 : index
    %c0_44 = arith.constant 0 : index
    %60 = vector.load %arg11[%c0_43, %c0_44] : memref<1x128xf32, #tpu.memory_space<vmem>>, vector<1x128xf32>
    %61 = vector.broadcast %60 : vector<1x128xf32> to vector<2x128xf32>
    %62 = arith.addf %59, %61 : vector<2x128xf32>
    %63 = vector.extract_strided_slice %62 {offsets = [0, 0], sizes = [2, 32], strides = [1, 1]} : vector<2x128xf32> to vector<2x32xf32>
    %64 = arith.negf %63 : vector<2x32xf32>
    %65 = math.exp %64 : vector<2x32xf32>
    %cst_45 = arith.constant 1.000000e+00 : f32
    %66 = vector.broadcast %cst_45 : f32 to vector<2x32xf32>
    %67 = arith.addf %66, %65 : vector<2x32xf32>
    %68 = arith.divf %66, %67 : vector<2x32xf32>
    %69 = vector.extract_strided_slice %62 {offsets = [0, 32], sizes = [2, 32], strides = [1, 1]} : vector<2x128xf32> to vector<2x32xf32>
    %70 = arith.negf %69 : vector<2x32xf32>
    %71 = math.exp %70 : vector<2x32xf32>
    %cst_46 = arith.constant 1.000000e+00 : f32
    %72 = vector.broadcast %cst_46 : f32 to vector<2x32xf32>
    %73 = arith.addf %72, %71 : vector<2x32xf32>
    %74 = arith.divf %72, %73 : vector<2x32xf32>
    %75 = vector.extract_strided_slice %62 {offsets = [0, 64], sizes = [2, 32], strides = [1, 1]} : vector<2x128xf32> to vector<2x32xf32>
    %76 = math.tanh %75 : vector<2x32xf32>
    %77 = vector.extract_strided_slice %62 {offsets = [0, 96], sizes = [2, 32], strides = [1, 1]} : vector<2x128xf32> to vector<2x32xf32>
    %78 = arith.negf %77 : vector<2x32xf32>
    %79 = math.exp %78 : vector<2x32xf32>
    %cst_47 = arith.constant 1.000000e+00 : f32
    %80 = vector.broadcast %cst_47 : f32 to vector<2x32xf32>
    %81 = arith.addf %80, %79 : vector<2x32xf32>
    %82 = arith.divf %80, %81 : vector<2x32xf32>
    %83 = arith.mulf %74, %11 : vector<2x32xf32>
    %84 = arith.mulf %68, %76 : vector<2x32xf32>
    %85 = arith.addf %83, %84 : vector<2x32xf32>
    %86 = math.tanh %85 : vector<2x32xf32>
    %87 = arith.mulf %82, %86 : vector<2x32xf32>
    %c0_48 = arith.constant 0 : index
    %c0_49 = arith.constant 0 : index
    %88 = vector.load %arg12[%c0_48, %c0_49] : memref<2x32xf32, #tpu.memory_space<vmem>>, vector<2x32xf32>
    tpu.vector_store %arg12[%c0_48, %c0_49], %87 {strides = array<i32>} : memref<2x32xf32, #tpu.memory_space<vmem>>, vector<2x32xf32>,
    %c0_50 = arith.constant 0 : index
    %c0_51 = arith.constant 0 : index
    %89 = vector.load %arg13[%c0_50, %c0_51] : memref<2x32xf32, #tpu.memory_space<vmem>>, vector<2x32xf32>
    tpu.vector_store %arg13[%c0_50, %c0_51], %85 {strides = array<i32>} : memref<2x32xf32, #tpu.memory_space<vmem>>, vector<2x32xf32>,
    return
  }
  func.func @transform_1(%arg0: i32, %arg1: memref<2xi32, #tpu.memory_space<smem>>) -> (i32, i32) {
    %c0_i32 = arith.constant 0 : i32
    %c0_i32_0 = arith.constant 0 : i32
    %c0_i32_1 = arith.constant 0 : i32
    return %c0_i32, %c0_i32_0 : i32, i32
  }
  func.func @transform_2(%arg0: i32, %arg1: memref<2xi32, #tpu.memory_space<smem>>) -> (i32, i32) {
    %c0_i32 = arith.constant 0 : i32
    %c0_i32_0 = arith.constant 0 : i32
    %c0_i32_1 = arith.constant 0 : i32
    return %c0_i32, %c0_i32_0 : i32, i32
  }
  func.func @transform_3(%arg0: i32, %arg1: memref<2xi32, #tpu.memory_space<smem>>) -> (i32, i32, i32) {
    %c0_i32 = arith.constant 0 : i32
    %c0_i32_0 = arith.constant 0 : i32
    %c0_i32_1 = arith.constant 0 : i32
    %c0_i32_2 = arith.constant 0 : i32
    return %c0_i32, %c0_i32_0, %c0_i32_1 : i32, i32, i32
  }
  func.func @transform_4(%arg0: i32, %arg1: memref<2xi32, #tpu.memory_space<smem>>) -> (i32, i32) {
    %c0_i32 = arith.constant 0 : i32
    %c0_i32_0 = arith.constant 0 : i32
    %c0_i32_1 = arith.constant 0 : i32
    return %c0_i32, %c0_i32_0 : i32, i32
  }
  func.func @transform_5(%arg0: i32, %arg1: memref<2xi32, #tpu.memory_space<smem>>) -> (i32, i32) {
    %c0_i32 = arith.constant 0 : i32
    %c0_i32_0 = arith.constant 0 : i32
    %c0_i32_1 = arith.constant 0 : i32
    return %c0_i32, %c0_i32_0 : i32, i32
  }
  func.func @transform_6(%arg0: i32, %arg1: memref<2xi32, #tpu.memory_space<smem>>) -> (i32, i32) {
    %c0_i32 = arith.constant 0 : i32
    %c0_i32_0 = arith.constant 0 : i32
    %c0_i32_1 = arith.constant 0 : i32
    return %c0_i32, %c0_i32_0 : i32, i32
  }
  func.func @transform_7(%arg0: i32, %arg1: memref<2xi32, #tpu.memory_space<smem>>) -> (i32, i32) {
    %c0_i32 = arith.constant 0 : i32
    %c0_i32_0 = arith.constant 0 : i32
    %c0_i32_1 = arith.constant 0 : i32
    return %c0_i32, %c0_i32_0 : i32, i32
  }
  func.func @transform_8(%arg0: i32, %arg1: memref<2xi32, #tpu.memory_space<smem>>) -> (i32, i32) {
    %c0_i32 = arith.constant 0 : i32
    %c0_i32_0 = arith.constant 0 : i32
    %c0_i32_1 = arith.constant 0 : i32
    return %c0_i32, %c0_i32_0 : i32, i32
  }
  func.func @transform_9(%arg0: i32, %arg1: memref<2xi32, #tpu.memory_space<smem>>) -> (i32, i32) {
    %c0_i32 = arith.constant 0 : i32
    %c0_i32_0 = arith.constant 0 : i32
    %c0_i32_1 = arith.constant 0 : i32
    return %c0_i32, %c0_i32_0 : i32, i32
  }
  func.func @transform_10(%arg0: i32, %arg1: memref<2xi32, #tpu.memory_space<smem>>) -> (i32, i32) {
    %c0_i32 = arith.constant 0 : i32
    %c0_i32_0 = arith.constant 0 : i32
    %c0_i32_1 = arith.constant 0 : i32
    return %c0_i32, %c0_i32_0 : i32, i32
  }
  func.func @transform_11(%arg0: i32, %arg1: memref<2xi32, #tpu.memory_space<smem>>) -> (i32, i32) {
    %c0_i32 = arith.constant 0 : i32
    %c0_i32_0 = arith.constant 0 : i32
    %c0_i32_1 = arith.constant 0 : i32
    return %c0_i32, %c0_i32_0 : i32, i32
  }
}

</mosaic_0001>

<llo_original>
// kernel: tpu_custom_call.1
$region0: #{tpu_custom_call.1}
  #allocation0 [shape = 'u32[]', space=smem, size = 0x4, offset = 0x4, fixed_abs, tag = 'smem constant byte address 0x4 - core index']
  #allocation1 [shape = 'u32[72,128]{1,0:T(1,128)}', space=vmem, size = 0x9000, scoped, tag = 'internal scratch']
  #allocation2 [shape = 'f32[2,32]{1,0:T(2,128)}', space=vmem, size = 0x400, scoped, tag = 'scratch operand']
  #allocation3 [shape = 's32[2]{0}', space=sflag, size = 0x8, scoped, tag = 'scratch operand']
  #allocation4 [shape = 's32[1]{0}', space=sflag, size = 0x4, scoped, tag = 'scoped memory for tpu_custom_call.1']
  #allocation5 [shape = 'u8[512]{0}', space=smem, size = 0x200, scoped, tag = 'prefetched SMEM operand 0']
  #allocation15 [shape = 's32[]', space=sflag, size = 0x4, offset = 0, fixed_abs, tag = 'sflag constant byte address 0x0 - dummy sync flag']
  #allocation16 [shape = 's32[]', space=sflag, size = 0x4, offset = 0, fixed_abs, tag = 'sflag constant byte address 0x0 - dummy sync flag']
  %s0 = inlined_call_operand.vmem [shape: s32[2], index: 0, kind: input, shape index: {}]
  %s1 = inlined_call_operand.vmem [shape: f32[64,32], index: 1, kind: input, shape index: {}]
  %s2 = inlined_call_operand.vmem [shape: f32[2,32], index: 2, kind: input, shape index: {}]
  %s3 = inlined_call_operand.vmem [shape: f32[2,32], index: 3, kind: input, shape index: {}]
  %s4 = inlined_call_operand.hbm [shape: f32[2,8,32], index: 4, kind: input, shape index: {}]
  %s5 = inlined_call_operand.vmem [shape: f32[2,8], index: 5, kind: input, shape index: {}]
  %s6 = inlined_call_operand.hbm [shape: f32[32,32], index: 6, kind: input, shape index: {}]
  %s7 = inlined_call_operand.hbm [shape: f32[32,32], index: 7, kind: input, shape index: {}]
  %s8 = inlined_call_operand.vmem [shape: f32[1,32], index: 8, kind: input, shape index: {}]
  %s9 = inlined_call_operand.vmem [shape: f32[96,128], index: 9, kind: input, shape index: {}]
  %s10 = inlined_call_operand.vmem [shape: f32[1,128], index: 10, kind: input, shape index: {}]
  %s11 = inlined_call_operand.hbm [shape: f32[2,32], index: 11, kind: output, shape index: {0}]
  %s12 = inlined_call_operand.hbm [shape: f32[2,32], index: 12, kind: output, shape index: {1}]
  %13 = xla_tuple %s11, %s12
  %s14 = sld [smem:[#allocation0]]
  $region126: #{tpu_custom_call.1} parent=0
    _
  %s16 = ssub.s32 1, %s14
  %s17 = scalar_select 0, %s16, %s14
  %s19 = sshll.u32 %s0, 4
  %s20 = int_to_ptr.vmem [resolvable:$true] %s19
  %22 = dma.vmem_to_smem %s20, 16, [#allocation5], [#allocation4]
  %24 = dma.done [#allocation4], 16
  %25 = sfence
  $region1: #{tpu_custom_call.1} parent=0
    #allocation6 [shape = 'u8[8192]{0}', space=vmem, size = 0x2000, scoped, tag = 'input window, operand 4, single buffered']
    #allocation7 [shape = 's32[1]{0}', space=sflag, size = 0x4, scoped, tag = 'scoped memory for tpu_custom_call.1']
    #allocation8 [shape = 's32[1]{0}', space=sflag, size = 0x4, scoped, tag = 'scoped memory for tpu_custom_call.1']
    #allocation9 [shape = 'u8[16384]{0}', space=vmem, size = 0x4000, scoped, tag = 'input window, operand 6, single buffered']
    #allocation10 [shape = 's32[1]{0}', space=sflag, size = 0x4, scoped, tag = 'scoped memory for tpu_custom_call.1']
    #allocation11 [shape = 'u8[16384]{0}', space=vmem, size = 0x4000, scoped, tag = 'input window, operand 7, single buffered']
    #allocation12 [shape = 'u8[1024]{0}', space=vmem, size = 0x400, scoped, tag = 'output window, operand 0, single buffered']
    #allocation13 [shape = 'u8[1024]{0}', space=vmem, size = 0x400, scoped, tag = 'output window, operand 1, single buffered']
    #allocation14 [shape = 's32[1]{0}', space=sflag, size = 0x4, scoped, tag = 'scoped memory for tpu_custom_call.1']
    %26 = vsyncpa [#allocation7], 0
    %27 = vsyncpa [#allocation10], 0
    %28 = vsyncpa [#allocation8], 0
    %29 = vsyncpa [#allocation14], 0
    // Predicated region
    $region2: #{tpu_custom_call.1} parent=1 // pred_check
      _
    $region3: #{tpu_custom_call.1} parent=1 // pred_check_branch
      %31 = sbr.rel (0) target = $region5
    $region4: #{tpu_custom_call.1} parent=1 // pred_region
      _
    $region5: #{tpu_custom_call.1} parent=1 // pred_fallthru
      _
    // Predicated region
    $region6: #{tpu_custom_call.1} parent=1 // pred_check
      _
    $region7: #{tpu_custom_call.1} parent=1 // pred_check_branch
      %33 = sbr.rel (0) target = $region9
    $region8: #{tpu_custom_call.1} parent=1 // pred_region
      _
    $region9: #{tpu_custom_call.1} parent=1 // pred_fallthru
      _
    // Predicated region
    $region10: #{tpu_custom_call.1} parent=1 // pred_check
      _
    $region11: #{tpu_custom_call.1} parent=1 // pred_check_branch
      %35 = sbr.rel (0) target = $region13
    $region12: #{tpu_custom_call.1} parent=1 // pred_region
      %37 = vsyncadd [#allocation7], 0
      %s38 = sshll.u32 %s4, 4
      %s39 = int_to_ptr.hbm [resolvable:$true] %s38
      %s40 = sshll.u32 [#allocation6], 4
      %s41 = int_to_ptr.vmem [resolvable:$true] %s40
      %46 = dma.hbm_to_vmem [thread:$0]  %s39, 256, %s41, [#allocation7], 128, 128, 8
    $region13: #{tpu_custom_call.1} parent=1 // pred_fallthru
      _
    // Predicated region
    $region14: #{tpu_custom_call.1} parent=1 // pred_check
      _
    $region15: #{tpu_custom_call.1} parent=1 // pred_check_branch
      %48 = sbr.rel (0) target = $region17
    $region16: #{tpu_custom_call.1} parent=1 // pred_region
      _
    $region17: #{tpu_custom_call.1} parent=1 // pred_fallthru
      _
    // Predicated region
    $region18: #{tpu_custom_call.1} parent=1 // pred_check
      _
    $region19: #{tpu_custom_call.1} parent=1 // pred_check_branch
      %50 = sbr.rel (0) target = $region21
    $region20: #{tpu_custom_call.1} parent=1 // pred_region
      %52 = vsyncadd [#allocation10], 0
      %s53 = sshll.u32 %s6, 4
      %s54 = int_to_ptr.hbm [resolvable:$true] %s53
      %s55 = sshll.u32 [#allocation9], 4
      %s56 = int_to_ptr.vmem [resolvable:$true] %s55
      %61 = dma.hbm_to_vmem [thread:$0]  %s54, 512, %s56, [#allocation10], 128, 128, 8
    $region21: #{tpu_custom_call.1} parent=1 // pred_fallthru
      _
    // Predicated region
    $region22: #{tpu_custom_call.1} parent=1 // pred_check
      _
    $region23: #{tpu_custom_call.1} parent=1 // pred_check_branch
      %63 = sbr.rel (0) target = $region25
    $region24: #{tpu_custom_call.1} parent=1 // pred_region
      %65 = vsyncadd [#allocation10], 0
      %s66 = sshll.u32 %s7, 4
      %s67 = int_to_ptr.hbm [resolvable:$true] %s66
      %s68 = sshll.u32 [#allocation11], 4
      %s69 = int_to_ptr.vmem [resolvable:$true] %s68
      %74 = dma.hbm_to_vmem [thread:$0]  %s67, 512, %s69, [#allocation10], 128, 128, 8
    $region25: #{tpu_custom_call.1} parent=1 // pred_fallthru
      _
    // Predicated region
    $region26: #{tpu_custom_call.1} parent=1 // pred_check
      _
    $region27: #{tpu_custom_call.1} parent=1 // pred_check_branch
      %76 = sbr.rel (0) target = $region29
    $region28: #{tpu_custom_call.1} parent=1 // pred_region
      _
    $region29: #{tpu_custom_call.1} parent=1 // pred_fallthru
      _
    // Predicated region
    $region30: #{tpu_custom_call.1} parent=1 // pred_check
      _
    $region31: #{tpu_custom_call.1} parent=1 // pred_check_branch
      %78 = sbr.rel (0) target = $region33
    $region32: #{tpu_custom_call.1} parent=1 // pred_region
      _
    $region33: #{tpu_custom_call.1} parent=1 // pred_fallthru
      _
    // Predicated region
    $region34: #{tpu_custom_call.1} parent=1 // pred_check
      _
    $region35: #{tpu_custom_call.1} parent=1 // pred_check_branch
      %80 = sbr.rel (0) target = $region37
    $region36: #{tpu_custom_call.1} parent=1 // pred_region
      _
    $region37: #{tpu_custom_call.1} parent=1 // pred_fallthru
      _
    // Predicated region
    $region38: #{tpu_custom_call.1} parent=1 // pred_check
      _
    $region39: #{tpu_custom_call.1} parent=1 // pred_check_branch
      %82 = sbr.rel (0) target = $region41
    $region40: #{tpu_custom_call.1} parent=1 // pred_region
      %84 = dma.done [#allocation7], 256
    $region41: #{tpu_custom_call.1} parent=1 // pred_fallthru
      _
    // Predicated region
    $region42: #{tpu_custom_call.1} parent=1 // pred_check
      _
    $region43: #{tpu_custom_call.1} parent=1 // pred_check_branch
      %86 = sbr.rel (0) target = $region45
    $region44: #{tpu_custom_call.1} parent=1 // pred_region
      %88 = dma.done [#allocation10], 512
    $region45: #{tpu_custom_call.1} parent=1 // pred_fallthru
      _
    // Predicated region
    $region46: #{tpu_custom_call.1} parent=1 // pred_check
      _
    $region47: #{tpu_custom_call.1} parent=1 // pred_check_branch
      %90 = sbr.rel (0) target = $region49
    $region48: #{tpu_custom_call.1} parent=1 // pred_region
      %92 = dma.done [#allocation10], 512
    $region49: #{tpu_custom_call.1} parent=1 // pred_fallthru
      _
    %s93 = sld [smem:[#allocation5]]
    %s94 = scalar_lea.vmem %s1, %s93
    // Predicated region
    $region50: #{tpu_custom_call.1} parent=1 // pred_check
      _
    $region51: #{tpu_custom_call.1} parent=1 // pred_check_branch
      %96 = sbr.rel target = $region53
    $region52: #{tpu_custom_call.1} parent=1 // pred_region
      // Predicated region
      $region65: #{tpu_custom_call.1} parent=52 // pred_check
        _
      $region66: #{tpu_custom_call.1} parent=52 // pred_check_branch
        %112 = sbr.rel (0) target = $region68
      $region67: #{tpu_custom_call.1} parent=52 // pred_region
        %s114 = ssub.s32 2, 1
        loop: start=0, step=1, limit=1
        $region69: #{tpu_custom_call.1} parent=67 // loop_pre_header
          _
        $region70: #{tpu_custom_call.1} parent=67 // loop_header
          %s116 = sphi 0, %s120
          %p117 = scmp.ge.s32.totalorder %s116, 1
          %s121 = sphi %s94, %s94
          %s122 = sphi [#allocation2], [#allocation2]
        $region71: #{tpu_custom_call.1} parent=67 // loop_header_branch
          %119 = sbr.rel (%p117) target = $region75
        $region72: #{tpu_custom_call.1} parent=67 // loop_body
          %v123 = vld [vmem:[%s121] sm:%s114]
          %124 = vst [vmem:[%s122] sm:%s114] %v123
        $region73: #{tpu_custom_call.1} parent=67 // loop_footer
          %s120 = sadd.s32 1, %s116
        $region74: #{tpu_custom_call.1} parent=67 // loop_footer_branch
          %115 = sbr.rel target = $region70
        $region75: #{tpu_custom_call.1} parent=67 // loop_exit
          _
      $region68: #{tpu_custom_call.1} parent=52 // pred_fallthru
        _
    $region53: #{tpu_custom_call.1} parent=1 // pred_fallthru
      _
    // Predicated region
    $region54: #{tpu_custom_call.1} parent=1 // pred_check
      _
    $region55: #{tpu_custom_call.1} parent=1 // pred_check_branch
      %98 = sbr.rel (0) target = $region57
    $region56: #{tpu_custom_call.1} parent=1 // pred_region
      %s100 = ssub.s32 2, 1
      loop: start=0, step=1, limit=1
      $region58: #{tpu_custom_call.1} parent=56 // loop_pre_header
        _
      $region59: #{tpu_custom_call.1} parent=56 // loop_header
        %s102 = sphi 0, %s106
        %p103 = scmp.ge.s32.totalorder %s102, 1
        %s107 = sphi %s94, %s94
        %s108 = sphi [#allocation2], [#allocation2]
      $region60: #{tpu_custom_call.1} parent=56 // loop_header_branch
        %105 = sbr.rel (%p103) target = $region64
      $region61: #{tpu_custom_call.1} parent=56 // loop_body
        %v109 = vld [vmem:[%s107] sm:%s100]
        %110 = vst [vmem:[%s108] sm:%s100] %v109
      $region62: #{tpu_custom_call.1} parent=56 // loop_footer
        %s106 = sadd.s32 1, %s102
      $region63: #{tpu_custom_call.1} parent=56 // loop_footer_branch
        %101 = sbr.rel target = $region59
      $region64: #{tpu_custom_call.1} parent=56 // loop_exit
        _
    $region57: #{tpu_custom_call.1} parent=1 // pred_fallthru
      _
    // Predicated region
    $region76: #{tpu_custom_call.1} parent=1 // pred_check
      _
    $region77: #{tpu_custom_call.1} parent=1 // pred_check_branch
      %127 = sbr.rel (0) target = $region79
    $region78: #{tpu_custom_call.1} parent=1 // pred_region
      %128 = vsyncadd [#allocation3], 16
    $region79: #{tpu_custom_call.1} parent=1 // pred_fallthru
      _
    %s129 = sld [smem:[#allocation5 + $0x1]]
    %s130 = scalar_lea.vmem %s1, %s129
    %s131 = scalar_lea.vmem [#allocation2], 1
    %s132 = scalar_lea.sflag [#allocation3], 1
    // Predicated region
    $region80: #{tpu_custom_call.1} parent=1 // pred_check
      _
    $region81: #{tpu_custom_call.1} parent=1 // pred_check_branch
      %134 = sbr.rel target = $region83
    $region82: #{tpu_custom_call.1} parent=1 // pred_region
      // Predicated region
      $region95: #{tpu_custom_call.1} parent=82 // pred_check
        _
      $region96: #{tpu_custom_call.1} parent=82 // pred_check_branch
        %150 = sbr.rel (0) target = $region98
      $region97: #{tpu_custom_call.1} parent=82 // pred_region
        %s152 = ssub.s32 2, 1
        loop: start=0, step=1, limit=1
        $region99: #{tpu_custom_call.1} parent=97 // loop_pre_header
          _
        $region100: #{tpu_custom_call.1} parent=97 // loop_header
          %s154 = sphi 0, %s158
          %p155 = scmp.ge.s32.totalorder %s154, 1
          %s159 = sphi %s130, %s130
          %s160 = sphi %s131, %s131
        $region101: #{tpu_custom_call.1} parent=97 // loop_header_branch
          %157 = sbr.rel (%p155) target = $region105
        $region102: #{tpu_custom_call.1} parent=97 // loop_body
          %v161 = vld [vmem:[%s159] sm:%s152]
          %162 = vst [vmem:[%s160] sm:%s152] %v161
        $region103: #{tpu_custom_call.1} parent=97 // loop_footer
          %s158 = sadd.s32 1, %s154
        $region104: #{tpu_custom_call.1} parent=97 // loop_footer_branch
          %153 = sbr.rel target = $region100
        $region105: #{tpu_custom_call.1} parent=97 // loop_exit
          _
      $region98: #{tpu_custom_call.1} parent=82 // pred_fallthru
        _
    $region83: #{tpu_custom_call.1} parent=1 // pred_fallthru
      _
    // Predicated region
    $region84: #{tpu_custom_call.1} parent=1 // pred_check
      _
    $region85: #{tpu_custom_call.1} parent=1 // pred_check_branch
      %136 = sbr.rel (0) target = $region87
    $region86: #{tpu_custom_call.1} parent=1 // pred_region
      %s138 = ssub.s32 2, 1
      loop: start=0, step=1, limit=1
      $region88: #{tpu_custom_call.1} parent=86 // loop_pre_header
        _
      $region89: #{tpu_custom_call.1} parent=86 // loop_header
        %s140 = sphi 0, %s144
        %p141 = scmp.ge.s32.totalorder %s140, 1
        %s145 = sphi %s130, %s130
        %s146 = sphi %s131, %s131
      $region90: #{tpu_custom_call.1} parent=86 // loop_header_branch
        %143 = sbr.rel (%p141) target = $region94
      $region91: #{tpu_custom_call.1} parent=86 // loop_body
        %v147 = vld [vmem:[%s145] sm:%s138]
        %148 = vst [vmem:[%s146] sm:%s138] %v147
      $region92: #{tpu_custom_call.1} parent=86 // loop_footer
        %s144 = sadd.s32 1, %s140
      $region93: #{tpu_custom_call.1} parent=86 // loop_footer_branch
        %139 = sbr.rel target = $region89
      $region94: #{tpu_custom_call.1} parent=86 // loop_exit
        _
    $region87: #{tpu_custom_call.1} parent=1 // pred_fallthru
      _
    // Predicated region
    $region106: #{tpu_custom_call.1} parent=1 // pred_check
      _
    $region107: #{tpu_custom_call.1} parent=1 // pred_check_branch
      %165 = sbr.rel (0) target = $region109
    $region108: #{tpu_custom_call.1} parent=1 // pred_region
      %166 = vsyncadd %s132, 16
    $region109: #{tpu_custom_call.1} parent=1 // pred_fallthru
      _
    %v167 = vld [vmem:[%s2] sm:$0x3]
    %v168 = vld [vmem:[%s3] sm:$0x3]
    %v169 = vld [vmem:[#allocation6] sm:$0xff]
    %v170 = vld [vmem:[#allocation6 + $0x8] sm:$0xff]
    %v171 = vld [vmem:[#allocation9] sm:$0xff]
    %v172 = vld [vmem:[#allocation9 + $0x8] sm:$0xff]
    %v173 = vld [vmem:[#allocation9 + $0x10] sm:$0xff]
    %v174 = vld [vmem:[#allocation9 + $0x18] sm:$0xff]
    %vm175 = vcmask 261120
    %v177 = vsel %vm175, %v167, 0
    %179 = vmatpush.msra.mxu0 0.0
    %180 = vmatpush.msra.mxu0 0.0
    %181 = vmatpush.msra.mxu0 0.0
    %182 = vmatpush.msra.mxu0 0.0
    %183 = vmatpush.msra.mxu0 0.0
    %184 = vmatpush.msra.mxu0 0.0
    %185 = vmatpush.msra.mxu0 0.0
    %186 = vmatpush.msra.mxu0 0.0
    %187 = vmatpush.msra.mxu0 0.0
    %188 = vmatpush.msra.mxu0 0.0
    %189 = vmatpush.msra.mxu0 0.0
    %190 = vmatpush.msra.mxu0 0.0
    %191 = vmatpush.msra.mxu0 %v174
    %192 = vmatpush.msra.mxu0 %v173
    %193 = vmatpush.msra.mxu0 %v172
    %194 = vmatpush.msra.mxu0 %v171
    %195 = vmatmul.f32.gmra.mxu0 %v177
    %v196 = vpop.f32.mrf.mxu0
    %v197 = vadd.f32 0.0, %v196
    %198 = vdwg.mxu0
    %v199 = vld [vmem:[#allocation11] sm:$0xff]
    %v200 = vld [vmem:[#allocation11 + $0x8] sm:$0xff]
    %v201 = vld [vmem:[#allocation11 + $0x10] sm:$0xff]
    %v202 = vld [vmem:[#allocation11 + $0x18] sm:$0xff]
    %v204 = vsel %vm175, %v169, 0
    %v207 = vsel %vm175, %v170, 0
    %209 = vmatpush.msra.mxu0 0.0
    %210 = vmatpush.msra.mxu0 0.0
    %211 = vmatpush.msra.mxu0 0.0
    %212 = vmatpush.msra.mxu0 0.0
    %213 = vmatpush.msra.mxu0 0.0
    %214 = vmatpush.msra.mxu0 0.0
    %215 = vmatpush.msra.mxu0 0.0
    %216 = vmatpush.msra.mxu0 0.0
    %217 = vmatpush.msra.mxu0 0.0
    %218 = vmatpush.msra.mxu0 0.0
    %219 = vmatpush.msra.mxu0 0.0
    %220 = vmatpush.msra.mxu0 0.0
    %221 = vmatpush.msra.mxu0 %v202
    %222 = vmatpush.msra.mxu0 %v201
    %223 = vmatpush.msra.mxu0 %v200
    %224 = vmatpush.msra.mxu0 %v199
    %225 = vmatmul.f32.gmra.mxu0 %v204
    %v226 = vpop.f32.mrf.mxu0
    %v227 = vadd.f32 0.0, %v226
    %228 = vmatmul.f32.gmra.mxu0 %v207
    %v229 = vpop.f32.mrf.mxu0
    %v230 = vadd.f32 0.0, %v229
    %231 = vdwg.mxu0
    %v233 = vrot.slane %v197, 1
    %v234 = vperm.slane %v197, 0
    %v235 = vperm.slane %v233, 0
    %v238 = vadd.f32 %v227, %v234
    %v239 = vadd.f32 %v230, %v235
    %v240 = vtanh.pop %v238
    %v241 = vtanh.pop %v239
    %v242 = vld [vmem:[%s8] sm:$0x1]
    %v244 = vperm.slane %v242, 0
    %v246 = vmul.f32 %v240, %v244
    %v247 = vmul.f32 %v241, %v244
    %v248 = vsel %vm175, %v246, 0.0
    %249 = vadd.xlane.f32.xlu0 %v248
    %v250 = vpop.xlane.xlu0 %249
    %v251 = vsel %vm175, %v247, 0.0
    %252 = vadd.xlane.f32.xlu0 %v251
    %v253 = vpop.xlane.xlu0 %252
    %v254 = vld [vmem:[%s5] sm:$0x3]
    %vm255 = vcmp.gt.f32.partialorder %v254, 0.0
    %v258 = vlaneseq
    %v259 = vand.u32 %v258, 127
    %v260 = vperm.slane %v250, %v259
    %v261 = vperm.slane %v253, %v259
    %vm262 = vcmask 1041409
    %v263 = vsel %vm262, %v261, %v260
    %v265 = vsel %vm255, -1e+10, %v263
    %vm266 = vcmask 58368
    %v267 = vsel %vm266, %v265, -inf
    %268 = vmax.xlane.f32.xlu0 %v267
    %v269 = vpop.xlane.xlu0 %268
    %v270 = vsub.f32 %v265, %v269
    %v271 = vmul.f32 %v270, 1.442695
    %v272 = vpow.pop %v271
    %v273 = vsel %vm266, %v272, 0.0
    %274 = vadd.xlane.f32.xlu0 %v273
    %v275 = vpop.xlane.xlu0 %274
    %v276 = vrcp.pop %v275
    %v277 = vmul.f32 %v275, %v276
    %v278 = vsub.f32 1.0, %v277
    %v279 = vmul.f32 %v276, %v278
    %v280 = vadd.f32 %v276, %v279
    %vm281 = vweird.f32 %v275
    %vm282 = vweird.f32 %v276
    %vm283 = vmor %vm281, %vm282
    %v284 = vsel %vm283, %v276, %v280
    %v285 = vand.u32 2147483647, %v275
    %vm286 = vcmp.eq.f32.partialorder %v285, 8.507059e+37
    %v287 = vand.u32 %v275, 2147483648
    %v288 = vor.u32 1.1754944e-38, %v287
    %v289 = vsel %vm286, %v288, %v284
    %v290 = vmul.f32 %v272, %v289
    %v291 = vperm.slane %v290, 0
    %v292 = vlaneseq
    %v293 = vshrl.u32 %v292, 7
    %295 = vset.pattern.permute.xlu0 %v293
    %296 = vperm.xlu0 %295, %v291
    %v297 = vpop.permute.xlu0 %296
    %v298 = vperm.slane %v290, 1
    %v299 = vlaneseq
    %v300 = vshrl.u32 %v299, 7
    %302 = vset.pattern.permute.xlu0 %v300
    %303 = vperm.xlu0 %302, %v298
    %v304 = vpop.permute.xlu0 %303
    %v305 = vmul.f32 %v297, %v169
    %v306 = vmul.f32 %v304, %v170
    %v307 = vsel %vm175, %v305, 0.0
    %v308 = vrot.slane %v307, 4
    %v309 = vadd.f32 %v307, %v308
    %v310 = vrot.slane %v309, 2
    %v311 = vadd.f32 %v309, %v310
    %v312 = vrot.slane %v311, 1
    %v313 = vadd.f32 %v311, %v312
    %v314 = vsel %vm175, %v306, 0.0
    %v315 = vrot.slane %v314, 4
    %v316 = vadd.f32 %v314, %v315
    %v317 = vrot.slane %v316, 2
    %v318 = vadd.f32 %v316, %v317
    %v319 = vrot.slane %v318, 1
    %v320 = vadd.f32 %v318, %v319
    %s321 = sld [smem:[#allocation5]]
    %s322 = smul.u32 1, 1
    %s323 = sshll.u32 %s322, 4
    %324 = dma.done [#allocation3], %s323
    %s325 = sld [smem:[#allocation5 + $0x1]]
    %s326 = sshll.u32 %s322, 4
    %327 = dma.done %s132, %s326
    %v328 = vld [vmem:[#allocation2] sm:$0x3]
    %v331 = vsel %vm262, %v320, %v313
    %332 = vrot.lane.b32.xlu0 %v331, 32
    %v333 = vpop.permute.xlu0 %332
    %335 = vrot.lane.b32.xlu0 %v167, 64
    %v336 = vpop.permute.xlu0 %335
    %v338 = vsel %vm175, %v328, %v333
    %vm339 = vcmask 523264
    %v340 = vsel %vm339, %v338, %v336
    %v341 = vld [vmem:[%s9] sm:$0xff]
    %v342 = vld [vmem:[%s9 + $0x8] sm:$0xff]
    %v343 = vld [vmem:[%s9 + $0x10] sm:$0xff]
    %v344 = vld [vmem:[%s9 + $0x18] sm:$0xff]
    %v345 = vld [vmem:[%s9 + $0x20] sm:$0xff]
    %v346 = vld [vmem:[%s9 + $0x28] sm:$0xff]
    %v347 = vld [vmem:[%s9 + $0x30] sm:$0xff]
    %v348 = vld [vmem:[%s9 + $0x38] sm:$0xff]
    %v349 = vld [vmem:[%s9 + $0x40] sm:$0xff]
    %v350 = vld [vmem:[%s9 + $0x48] sm:$0xff]
    %v351 = vld [vmem:[%s9 + $0x50] sm:$0xff]
    %v352 = vld [vmem:[%s9 + $0x58] sm:$0xff]
    %v353 = vld [vmem:[%s10] sm:$0x1]
    %v355 = vperm.slane %v353, 0
    %vm357 = vcmask 785408
    %v359 = vsel %vm357, %v340, 0
    %361 = vmatpush.msra.mxu0 0.0
    %362 = vmatpush.msra.mxu0 0.0
    %363 = vmatpush.msra.mxu0 0.0
    %364 = vmatpush.msra.mxu0 0.0
    %365 = vmatpush.msra.mxu0 %v352
    %366 = vmatpush.msra.mxu0 %v351
    %367 = vmatpush.msra.mxu0 %v350
    %368 = vmatpush.msra.mxu0 %v349
    %369 = vmatpush.msra.mxu0 %v348
    %370 = vmatpush.msra.mxu0 %v347
    %371 = vmatpush.msra.mxu0 %v346
    %372 = vmatpush.msra.mxu0 %v345
    %373 = vmatpush.msra.mxu0 %v344
    %374 = vmatpush.msra.mxu0 %v343
    %375 = vmatpush.msra.mxu0 %v342
    %376 = vmatpush.msra.mxu0 %v341
    %377 = vmatmul.f32.gmra.mxu0 %v359
    %v378 = vpop.f32.mrf.mxu0
    %v379 = vadd.f32 %v355, %v378
    %380 = vdwg.mxu0
    %v381 = vxor.u32 %v379, 2147483648
    %v382 = vmul.f32 %v381, 1.442695
    %v383 = vpow.pop %v382
    %v384 = vadd.f32 %v383, 1.0
    %v385 = vrcp.pop %v384
    %v386 = vmul.f32 %v384, %v385
    %v387 = vsub.f32 1.0, %v386
    %v388 = vmul.f32 %v385, %v387
    %v389 = vadd.f32 %v385, %v388
    %vm390 = vweird.f32 %v384
    %vm391 = vweird.f32 %v385
    %vm392 = vmor %vm390, %vm391
    %v393 = vsel %vm392, %v385, %v389
    %v394 = vand.u32 2147483647, %v384
    %vm395 = vcmp.eq.f32.partialorder %v394, 8.507059e+37
    %v396 = vand.u32 %v384, 2147483648
    %v397 = vor.u32 1.1754944e-38, %v396
    %v398 = vsel %vm395, %v397, %v393
    %v399 = vmul.f32 1.0, %v398
    %v400 = vtanh.pop %v379
    %402 = vrot.lane.b32.xlu0 %v168, 32
    %v403 = vpop.permute.xlu0 %402
    %v405 = vmul.f32 %v399, %v403
    %407 = vrot.lane.b32.xlu0 %v400, 64
    %v408 = vpop.permute.xlu0 %407
    %v410 = vmul.f32 %v399, %v408
    %412 = vrot.lane.b32.xlu0 %v410, 32
    %v413 = vpop.permute.xlu0 %412
    %v415 = vadd.f32 %v405, %v413
    %v416 = vtanh.pop %v415
    %418 = vrot.lane.b32.xlu0 %v416, 64
    %v419 = vpop.permute.xlu0 %418
    %v421 = vmul.f32 %v399, %v419
    %423 = vrot.lane.b32.xlu0 %v421, 32
    %v424 = vpop.permute.xlu0 %423
    %vm426 = vcmask 254976
    %427 = vst.msk [vmem:[#allocation12] sm:$0x3] %vm426, %v424
    %429 = vrot.lane.b32.xlu0 %v415, 96
    %v430 = vpop.permute.xlu0 %429
    %432 = vst.msk [vmem:[#allocation13] sm:$0x3] %vm426, %v430
    // Predicated region
    $region110: #{tpu_custom_call.1} parent=1 // pred_check
      _
    $region111: #{tpu_custom_call.1} parent=1 // pred_check_branch
      %434 = sbr.rel (0) target = $region113
    $region112: #{tpu_custom_call.1} parent=1 // pred_region
      %436 = vsyncadd [#allocation8], 0
      %s438 = sshll.u32 [#allocation12], 4
      %s439 = int_to_ptr.vmem [resolvable:$true] %s438
      %s440 = sshll.u32 %s11, 4
      %s441 = int_to_ptr.hbm [resolvable:$true] %s440
      %443 = dma.vmem_to_hbm [thread:$0]  %s439, 32, %s441, [#allocation8]
    $region113: #{tpu_custom_call.1} parent=1 // pred_fallthru
      _
    // Predicated region
    $region114: #{tpu_custom_call.1} parent=1 // pred_check
      _
    $region115: #{tpu_custom_call.1} parent=1 // pred_check_branch
      %445 = sbr.rel (0) target = $region117
    $region116: #{tpu_custom_call.1} parent=1 // pred_region
      %447 = vsyncadd [#allocation14], 0
      %s449 = sshll.u32 [#allocation13], 4
      %s450 = int_to_ptr.vmem [resolvable:$true] %s449
      %s451 = sshll.u32 %s12, 4
      %s452 = int_to_ptr.hbm [resolvable:$true] %s451
      %454 = dma.vmem_to_hbm [thread:$0]  %s450, 32, %s452, [#allocation14]
    $region117: #{tpu_custom_call.1} parent=1 // pred_fallthru
      _
    // Predicated region
    $region118: #{tpu_custom_call.1} parent=1 // pred_check
      _
    $region119: #{tpu_custom_call.1} parent=1 // pred_check_branch
      %456 = sbr.rel (0) target = $region121
    $region120: #{tpu_custom_call.1} parent=1 // pred_region
      %458 = dma.done [#allocation8], 32
    $region121: #{tpu_custom_call.1} parent=1 // pred_fallthru
      _
    // Predicated region
    $region122: #{tpu_custom_call.1} parent=1 // pred_check
      _
    $region123: #{tpu_custom_call.1} parent=1 // pred_check_branch
      %460 = sbr.rel (0) target = $region125
    $region124: #{tpu_custom_call.1} parent=1 // pred_region
      %462 = dma.done [#allocation14], 32
    $region125: #{tpu_custom_call.1} parent=1 // pred_fallthru
      _
    %463 = vsyncpa [#allocation7], 1
    %464 = vsyncpa [#allocation10], 1
    %465 = vsyncpa [#allocation8], 1
    %466 = vsyncpa [#allocation14], 1
  %467 = vsyncmov [#allocation3]
  %s468 = vpop.sfrf %467
  %p469 = scmp.eq.s32.totalorder %s468, 0
  %p470 = pneg %p469
  %472 = shalt.err (%p470)
  %s473 = scalar_lea.sflag [#allocation3], 1
  %474 = vsyncmov %s473
  %s475 = vpop.sfrf %474
  %p476 = scmp.eq.s32.totalorder %s475, 0
  %p477 = pneg %p476
  %479 = shalt.err (%p477)

</llo_original>
